<compile_context>
chip_gen: v5e
topology: v5e:2x2
jax: 0.10.0
libtpu: 0.0.40
codegen_flags: <defaults>
</compile_context>

<pallas_src>
import jax
import jax.numpy as jnp
from jax.experimental import pallas as pl
from jax.experimental.pallas import tpu as pltpu


def _clamp_kernel(alpha_ref, x_ref, o_ref):
    # Elementwise hot path on the VPU: clamp(x, 0, alpha).
    x = x_ref[...]
    a = alpha_ref[0].astype(x.dtype)            # SMEM f32 scalar -> x.dtype
    zero = jnp.zeros((), dtype=x.dtype)
    o_ref[...] = jnp.minimum(a, jnp.maximum(zero, x))


def _round_up(v: int, m: int) -> int:
    return -(-v // m) * m


def _sublane_multiple(dtype) -> int:
    # Sub-32-bit dtypes pack along sublanes: f32 -> 8, bf16 -> 16, int8 -> 32.
    itemsize = jnp.dtype(dtype).itemsize
    return max(8, 32 // max(itemsize, 1))


def _pick_2d_layout(total: int, max_lanes: int = 2048):
    """Factor `total` (multiple of 128) into (rows, lanes), lanes a big multiple of 128."""
    assert total % 128 == 0
    lanes = 128
    for cand in range(min(max_lanes, total) // 128, 0, -1):
        k2 = 128 * cand
        if total % k2 == 0:
            lanes = k2
            break
    return total // lanes, lanes


def _chip_tuning():
    """(target_block_bytes, vmem_limit_bytes) per TPU generation."""
    kind = ""
    try:
        kind = jax.devices()[0].device_kind.lower()
    except Exception:
        pass
    if "v5" in kind:
        # v5e: ~0.82 TB/s — 4 MiB blocks already amortize the ~0.35 us/step overhead.
        return 4 * 1024 * 1024, 48 * 1024 * 1024
    if "7" in kind:
        # v7x: 64 MiB physical VMEM per TC — ~10 MiB blocks (4x footprint = 40 MiB < 48).
        return 10 * 1024 * 1024, 48 * 1024 * 1024
    # v6e (default): 128 MiB VMEM, ~1.4 TB/s — larger blocks, larger scoped limit.
    return 14 * 1024 * 1024, 80 * 1024 * 1024


def encoder_last_act(
    x: jax.Array,
    alpha,
    *,
    target_block_bytes: int | None = None,
    vmem_limit_bytes: int | None = None,
    donate_input: bool = False,
) -> jax.Array:
    """Pallas TPU implementation of EncoderLastAct: clamp(x, 0, alpha), any shape."""
    orig_shape = x.shape
    dtype = x.dtype
    total = int(x.size)
    if total == 0:
        return x

    default_target, default_vmem = _chip_tuning()
    if target_block_bytes is None:
        target_block_bytes = default_target
    if vmem_limit_bytes is None:
        vmem_limit_bytes = max(default_vmem, 4 * target_block_bytes + 4 * 1024 * 1024)

    itemsize = jnp.dtype(dtype).itemsize
    sub = _sublane_multiple(dtype)

    # Pad-and-slice: lane-dense re-view always has a last dim that is a
    # multiple of 128 (no masked partial stores, no single-block blow-ups).
    x_flat = x.reshape(-1)
    padded = _round_up(total, 128)
    if padded != total:
        x_flat = jnp.pad(x_flat, (0, padded - total))
    n2, k2 = _pick_2d_layout(padded)
    x2 = x_flat.reshape(n2, k2)

    # Block only the leading dim; aim for ~target_block_bytes per block.
    row_bytes = k2 * itemsize
    bn = max(1, target_block_bytes // row_bytes)
    bn = max(sub, (bn // sub) * sub)             # dtype-aware sublane multiple
    # Cap so big tensors get >=~4 blocks (pipelining + v7x 2-TC sharding),
    # subject to a ~512 KiB per-block floor.
    floor_bn = max(sub, _round_up(max(1, (512 * 1024) // row_bytes), sub))
    quarter_bn = _round_up(pl.cdiv(n2, 4), sub)
    if quarter_bn >= floor_bn:
        bn = min(bn, quarter_bn)
    if bn >= n2:
        bn = n2                                  # full extent along rows (legal)
    grid = (pl.cdiv(n2, bn),)                    # ragged tail masked by Pallas

    # alpha as a runtime SMEM scalar -> one compiled kernel across alpha values.
    alpha_arr = jnp.asarray([alpha], dtype=jnp.float32)

    out2 = pl.pallas_call(
        _clamp_kernel,
        out_shape=jax.ShapeDtypeStruct((n2, k2), dtype),
        grid=grid,
        in_specs=[
            pl.BlockSpec(memory_space=pltpu.MemorySpace.SMEM),   # alpha scalar
            pl.BlockSpec((bn, k2), lambda i: (i, 0)),
        ],
        out_specs=pl.BlockSpec((bn, k2), lambda i: (i, 0)),
        input_output_aliases=({1: 0} if donate_input else {}),
        compiler_params=pltpu.CompilerParams(
            dimension_semantics=("parallel",),
            vmem_limit_bytes=vmem_limit_bytes,
        ),
    )(alpha_arr, x2)

    out_flat = out2.reshape(-1)
    if padded != total:
        out_flat = out_flat[:total]
    return out_flat.reshape(orig_shape)


if __name__ == "__main__":
    # EncoderLastAct has one scalar hyperparameter, alpha; no learned weights.
    alpha = 0.5
    key = jax.random.PRNGKey(0)
    k0, k1, k2_, k3 = jax.random.split(key, 4)

    # Module docstring: x is [N, k] with k = c * 4 * 4. Small shape: N=16, c=32 -> k=512.
    x_main = jax.random.normal(k0, (16, 512), dtype=jnp.float32)
    # Non-128-divisible total -> exercises the pad-and-slice path.
    x_odd = jax.random.normal(k1, (5, 48), dtype=jnp.float32)
    # bf16 input (sublane-packed dtype path).
    x_bf16 = (jax.random.normal(k2_, (16, 512)) * 2.0).astype(jnp.bfloat16)
    # Multi-block + ragged-tail path (force small blocks so grid > 1).
    x_multi = jax.random.normal(k3, (130, 1024), dtype=jnp.float32)

    def ref(x):
        return jnp.minimum(jnp.asarray(alpha, x.dtype),
                           jnp.maximum(jnp.zeros((), x.dtype), x))

    ok = True
    for x, kwargs in (
        (x_main, {}),
        (x_odd, {}),
        (x_bf16, {}),
        (x_multi, {"target_block_bytes": 64 * 1024}),
    ):
        out = jax.block_until_ready(encoder_last_act(x, alpha, **kwargs))
        r = ref(x)
        ok &= out.shape == x.shape and out.dtype == x.dtype
        ok &= bool(jnp.allclose(out, r))

    assert ok, "mismatch vs reference clamp"
    print("KERNEL_OK")
</pallas_src>

<mosaic_0001>
module attributes {stable_mosaic.version = 11 : i64} {
  func.func @_clamp_kernel(%arg0: i32, %arg1: memref<1xf32, #tpu.memory_space<smem>>, %arg2: memref<4x2048xf32, #tpu.memory_space<vmem>>, %arg3: memref<4x2048xf32, #tpu.memory_space<vmem>>) attributes {dimension_semantics = [#tpu.dimension_semantics<parallel>], iteration_bounds = array<i64: 1>, scalar_prefetch = 0 : i64, scratch_operands = 0 : i64, tpu.core_type = #tpu.core_type<tc>, window_params = [{transform_indices = @transform_0, window_bounds = array<i64: 1>}, {transform_indices = @transform_1, window_bounds = array<i64: 4, 2048>}, {transform_indices = @transform_2, window_bounds = array<i64: 4, 2048>}]} {
    %c0 = arith.constant 0 : index
    %c0_0 = arith.constant 0 : index
    %0 = vector.load %arg2[%c0, %c0_0] : memref<4x2048xf32, #tpu.memory_space<vmem>>, vector<4x2048xf32>
    %c0_1 = arith.constant 0 : index
    %1 = memref.load %arg1[%c0_1] : memref<1xf32, #tpu.memory_space<smem>>
    %cst = arith.constant 0.000000e+00 : f32
    %2 = vector.broadcast %cst : f32 to vector<4x2048xf32>
    %3 = arith.maximumf %2, %0 : vector<4x2048xf32>
    %4 = vector.broadcast %1 : f32 to vector<4x2048xf32>
    %5 = arith.minimumf %4, %3 : vector<4x2048xf32>
    %c0_2 = arith.constant 0 : index
    %c0_3 = arith.constant 0 : index
    %6 = vector.load %arg3[%c0_2, %c0_3] : memref<4x2048xf32, #tpu.memory_space<vmem>>, vector<4x2048xf32>
    tpu.vector_store %arg3[%c0_2, %c0_3], %5 {strides = array<i32>} : memref<4x2048xf32, #tpu.memory_space<vmem>>, vector<4x2048xf32>,
    return
  }
  func.func @transform_0(%arg0: i32) -> i32 {
    %c0_i32 = arith.constant 0 : i32
    %c0_i32_0 = arith.constant 0 : i32
    return %c0_i32 : i32
  }
  func.func @transform_1(%arg0: i32) -> (i32, i32) {
    %c0_i32 = arith.constant 0 : i32
    %c0_i32_0 = arith.constant 0 : i32
    return %arg0, %c0_i32 : i32, i32
  }
  func.func @transform_2(%arg0: i32) -> (i32, i32) {
    %c0_i32 = arith.constant 0 : i32
    %c0_i32_0 = arith.constant 0 : i32
    return %arg0, %c0_i32 : i32, i32
  }
}

</mosaic_0001>

<llo_original>
// kernel: tpu_custom_call.1
$region0: #{tpu_custom_call.1}
  #allocation0 [shape = 'u32[]', space=smem, size = 0x4, offset = 0x4, fixed_abs, tag = 'smem constant byte address 0x4 - core index']
  #allocation1 [shape = 'u32[72,128]{1,0:T(1,128)}', space=vmem, size = 0x9000, scoped, tag = 'internal scratch']
  #allocation2 [shape = 'f32[1]{0:T(128)S(6)}', space=smem, size = 0x200, scoped, tag = 'scoped memory for tpu_custom_call.1']
  %s0 = inlined_call_operand.<no memory space> [shape: f32[1], index: 0, kind: input, shape index: {}]
  %s1 = inlined_call_operand.hbm [shape: f32[4,2048], index: 1, kind: input, shape index: {}]
  %s2 = inlined_call_operand.hbm [shape: f32[4,2048], index: 2, kind: output, shape index: {}]
  %s3 = sld [smem:[#allocation0]]
  $region22: #{tpu_custom_call.1} parent=0
    _
  %s5 = ssub.s32 1, %s3
  %s6 = scalar_select 0, %s5, %s3
  %7 = sst [smem:[#allocation2]] %s0
  $region1: #{tpu_custom_call.1} parent=0
    #allocation3 [shape = 'u8[32768]{0}', space=vmem, size = 0x8000, scoped, tag = 'input window, operand 1, single buffered']
    #allocation4 [shape = 's32[1]{0}', space=sflag, size = 0x4, scoped, tag = 'scoped memory for tpu_custom_call.1']
    #allocation5 [shape = 's32[1]{0}', space=sflag, size = 0x4, scoped, tag = 'scoped memory for tpu_custom_call.1']
    #allocation6 [shape = 'u8[32768]{0}', space=vmem, size = 0x8000, scoped, tag = 'output window, operand 0, single buffered']
    %8 = vsyncpa [#allocation4], 0
    %9 = vsyncpa [#allocation5], 0
    // Predicated region
    $region2: #{tpu_custom_call.1} parent=1 // pred_check
      _
    $region3: #{tpu_custom_call.1} parent=1 // pred_check_branch
      %11 = sbr.rel (0) target = $region5
    $region4: #{tpu_custom_call.1} parent=1 // pred_region
      _
    $region5: #{tpu_custom_call.1} parent=1 // pred_fallthru
      _
    // Predicated region
    $region6: #{tpu_custom_call.1} parent=1 // pred_check
      _
    $region7: #{tpu_custom_call.1} parent=1 // pred_check_branch
      %13 = sbr.rel (0) target = $region9
    $region8: #{tpu_custom_call.1} parent=1 // pred_region
      %15 = vsyncadd [#allocation4], 0
      %s17 = sshll.u32 %s1, 4
      %s18 = int_to_ptr.hbm [resolvable:$true] %s17
      %s19 = sshll.u32 [#allocation3], 4
      %s20 = int_to_ptr.vmem [resolvable:$true] %s19
      %22 = dma.hbm_to_vmem [thread:$0]  %s18, 1024, %s20, [#allocation4]
    $region9: #{tpu_custom_call.1} parent=1 // pred_fallthru
      _
    // Predicated region
    $region10: #{tpu_custom_call.1} parent=1 // pred_check
      _
    $region11: #{tpu_custom_call.1} parent=1 // pred_check_branch
      %24 = sbr.rel (0) target = $region13
    $region12: #{tpu_custom_call.1} parent=1 // pred_region
      %26 = dma.done [#allocation4], 1024
    $region13: #{tpu_custom_call.1} parent=1 // pred_fallthru
      _
    %v27 = vld [vmem:[#allocation3] sm:$0xff]
    %v28 = vld [vmem:[#allocation3 + $0x8] sm:$0xff]
    %v29 = vld [vmem:[#allocation3 + $0x10] sm:$0xff]
    %v30 = vld [vmem:[#allocation3 + $0x18] sm:$0xff]
    %v31 = vld [vmem:[#allocation3 + $0x20] sm:$0xff]
    %v32 = vld [vmem:[#allocation3 + $0x28] sm:$0xff]
    %v33 = vld [vmem:[#allocation3 + $0x30] sm:$0xff]
    %v34 = vld [vmem:[#allocation3 + $0x38] sm:$0xff]
    %s35 = sld [smem:[#allocation2]]
    %v36 = vmax.f32 %v27, 0.0
    %v37 = vmax.f32 %v28, 0.0
    %v38 = vmax.f32 %v29, 0.0
    %v39 = vmax.f32 %v30, 0.0
    %v40 = vmax.f32 %v31, 0.0
    %v41 = vmax.f32 %v32, 0.0
    %v42 = vmax.f32 %v33, 0.0
    %v43 = vmax.f32 %v34, 0.0
    %v44 = vstv %s35
    %v45 = vmin.f32 %v44, %v36
    %v46 = vmin.f32 %v44, %v37
    %v47 = vmin.f32 %v44, %v38
    %v48 = vmin.f32 %v44, %v39
    %v49 = vmin.f32 %v44, %v40
    %v50 = vmin.f32 %v44, %v41
    %v51 = vmin.f32 %v44, %v42
    %v52 = vmin.f32 %v44, %v43
    %53 = vst [vmem:[#allocation6] sm:$0xff] %v45
    %54 = vst [vmem:[#allocation6 + $0x8] sm:$0xff] %v46
    %55 = vst [vmem:[#allocation6 + $0x10] sm:$0xff] %v47
    %56 = vst [vmem:[#allocation6 + $0x18] sm:$0xff] %v48
    %57 = vst [vmem:[#allocation6 + $0x20] sm:$0xff] %v49
    %58 = vst [vmem:[#allocation6 + $0x28] sm:$0xff] %v50
    %59 = vst [vmem:[#allocation6 + $0x30] sm:$0xff] %v51
    %60 = vst [vmem:[#allocation6 + $0x38] sm:$0xff] %v52
    // Predicated region
    $region14: #{tpu_custom_call.1} parent=1 // pred_check
      _
    $region15: #{tpu_custom_call.1} parent=1 // pred_check_branch
      %62 = sbr.rel (0) target = $region17
    $region16: #{tpu_custom_call.1} parent=1 // pred_region
      %64 = vsyncadd [#allocation5], 0
      %s66 = sshll.u32 [#allocation6], 4
      %s67 = int_to_ptr.vmem [resolvable:$true] %s66
      %s68 = sshll.u32 %s2, 4
      %s69 = int_to_ptr.hbm [resolvable:$true] %s68
      %71 = dma.vmem_to_hbm [thread:$0]  %s67, 1024, %s69, [#allocation5]
    $region17: #{tpu_custom_call.1} parent=1 // pred_fallthru
      _
    // Predicated region
    $region18: #{tpu_custom_call.1} parent=1 // pred_check
      _
    $region19: #{tpu_custom_call.1} parent=1 // pred_check_branch
      %73 = sbr.rel (0) target = $region21
    $region20: #{tpu_custom_call.1} parent=1 // pred_region
      %75 = dma.done [#allocation5], 1024
    $region21: #{tpu_custom_call.1} parent=1 // pred_fallthru
      _
    %76 = vsyncpa [#allocation4], 1
    %77 = vsyncpa [#allocation5], 1

</llo_original>
